<compile_context>
chip_gen: v6e
topology: v6e:2x2x1
jax: 0.10.0
libtpu: 0.0.40
codegen_flags: <defaults>
</compile_context>

<pallas_src>
import jax
import jax.numpy as jnp
from jax.experimental import pallas as pl
from jax.experimental.pallas import tpu as pltpu


def _round_up(x, m):
    return ((x + m - 1) // m) * m


# ---------------------------------------------------------------------------
# Kernel: one batch-tile of the fused MLP. BN affines are pre-folded into
# (w1_cat/w1_num, b1), (w2, b2), (w3, b3); dropout is identity in eval mode.
# ---------------------------------------------------------------------------
def fused_mlp_kernel(xc_ref, xn_ref, w1c_ref, w1n_ref, b1_ref,
                     w2_ref, b2_ref, w3_ref, b3_ref, o_ref):
    w1c = w1c_ref[...]
    cd = w1c.dtype  # matmul compute dtype (f32 or bf16); accumulation is f32

    # Layer 1: split Linear over (categorical | numerical) inputs -> ReLU.
    # In-kernel cast of the f32 x tiles to the MXU operand dtype.
    xc = xc_ref[...].astype(cd)
    xn = xn_ref[...].astype(cd)
    h = (jnp.dot(xc, w1c, preferred_element_type=jnp.float32)
         + jnp.dot(xn, w1n_ref[...], preferred_element_type=jnp.float32))
    h = jnp.maximum(h + b1_ref[...], 0.0)

    # Layer 2: Linear (BN1 folded) -> ReLU.
    h = jnp.dot(h.astype(cd), w2_ref[...], preferred_element_type=jnp.float32)
    h = jnp.maximum(h + b2_ref[...], 0.0)

    # Output projection (BN2 folded), narrow (tile, out_size) store.
    o_ref[...] = (jnp.dot(h.astype(cd), w3_ref[...],
                          preferred_element_type=jnp.float32)
                  + b3_ref[...])


# ---------------------------------------------------------------------------
# Wrapper: batch-tiled grid; weights resident in VMEM across the grid.
# ---------------------------------------------------------------------------
def fused_tabular_mlp(x_categorical, x_numerical, prepared, *, tile_n=2048):
    w1c = prepared["w1_cat"]; w1n = prepared["w1_num"]; b1 = prepared["b1"]
    w2 = prepared["w2"]; b2 = prepared["b2"]
    w3 = prepared["w3"]; b3 = prepared["b3"]
    out_size = prepared["out_size"]

    N, ncat = x_categorical.shape
    nnum = x_numerical.shape[1]
    H1 = w1c.shape[1]
    H2 = w2.shape[1]

    # Batch tile: tiny batches run as one block; otherwise guarantee >=2 grid
    # steps (so v7x's two TensorCores both get work) with 16-row alignment
    # (bf16 sublane packing; also fine for f32).
    if N <= 32:
        tile = N
    else:
        tile = min(tile_n, _round_up(pl.cdiv(N, 2), 16))
        tile = min(tile, _round_up(N, 16))
    grid = (pl.cdiv(N, tile),)

    w_itemsize = jnp.dtype(w2.dtype).itemsize
    weight_bytes = ((w1c.size + w1n.size + w2.size + w3.size) * w_itemsize
                    + (b1.size + b2.size + b3.size) * 4)
    flops = 2 * N * (ncat * H1 + nnum * H1 + H1 * H2 + H2 * out_size)
    bytes_accessed = (N * (ncat + nnum) * 4          # x (f32 in HBM)
                      + weight_bytes                 # weights read once
                      + N * out_size * 4)            # narrow f32 output
    cost = pl.CostEstimate(flops=flops, transcendentals=0,
                           bytes_accessed=bytes_accessed)

    # VMEM budget: double-buffered x/out tiles + (conservatively) double-
    # buffered resident weights + headroom; capped for v7x's 64 MiB VMEM.
    x_tile_bytes = tile * (ncat + nnum) * 4
    out_tile_bytes = tile * _round_up(out_size, 128) * 4  # VMEM lane padding
    vmem_limit = 2 * (x_tile_bytes + out_tile_bytes) + 2 * weight_bytes + (8 << 20)
    vmem_limit = int(max(16 << 20, min(56 << 20, vmem_limit)))

    return pl.pallas_call(
        fused_mlp_kernel,
        out_shape=jax.ShapeDtypeStruct((N, out_size), jnp.float32),
        grid=grid,
        in_specs=[
            pl.BlockSpec((tile, ncat), lambda i: (i, 0)),   # x_cat tile
            pl.BlockSpec((tile, nnum), lambda i: (i, 0)),   # x_num tile
            pl.BlockSpec((ncat, H1),   lambda i: (0, 0)),   # weights: resident
            pl.BlockSpec((nnum, H1),   lambda i: (0, 0)),
            pl.BlockSpec((1, H1),      lambda i: (0, 0)),
            pl.BlockSpec((H1, H2),     lambda i: (0, 0)),
            pl.BlockSpec((1, H2),      lambda i: (0, 0)),
            pl.BlockSpec((H2, out_size), lambda i: (0, 0)),
            pl.BlockSpec((1, out_size),  lambda i: (0, 0)),
        ],
        out_specs=pl.BlockSpec((tile, out_size), lambda i: (i, 0)),
        compiler_params=pltpu.CompilerParams(
            dimension_semantics=("parallel",),
            vmem_limit_bytes=vmem_limit,
        ),
        cost_estimate=cost,
    )(x_categorical, x_numerical, w1c, w1n, b1, w2, b2, w3, b3)


# ---------------------------------------------------------------------------
# Parameters: raw (PyTorch-style) params + fold/pad/cast prep for the kernel.
# ---------------------------------------------------------------------------
def init_raw_params(key, embedding_size, num_numerical_cols, output_size, layers):
    num_categorical_cols = sum(nf for _, nf in embedding_size)
    input_size = num_categorical_cols + num_numerical_cols
    h1, h2 = layers
    keys = jax.random.split(key, 3)

    def lin(k, fan_in, fan_out):
        w = jax.random.normal(k, (fan_in, fan_out), jnp.float32) * 0.1
        b = jnp.full((fan_out,), 0.01, jnp.float32)
        return w, b

    w1, b1 = lin(keys[0], input_size, h1)
    w2, b2 = lin(keys[1], h1, h2)
    w3, b3 = lin(keys[2], h2, output_size)

    def bn(n, g0, b0):
        return dict(gamma=jnp.full((n,), g0, jnp.float32),
                    beta=jnp.full((n,), b0, jnp.float32),
                    mean=jnp.zeros((n,), jnp.float32),
                    var=jnp.ones((n,), jnp.float32),
                    eps=1e-5)

    return dict(
        num_categorical_cols=num_categorical_cols,
        w1=w1, b1=b1, w2=w2, b2=b2, w3=w3, b3=b3,
        bn_num=bn(num_numerical_cols, 1.0, 0.0),
        bn1=bn(h1, 1.1, 0.05),
        bn2=bn(h2, 0.9, -0.05),
    )


def _bn_scale_shift(bn):
    scale = bn["gamma"] / jnp.sqrt(bn["var"] + bn["eps"])
    shift = bn["beta"] - bn["mean"] * scale
    return scale, shift


def prepare_params(raw, *, compute_dtype=jnp.float32):
    """Fold every eval-mode BatchNorm affine into the adjacent Linear, split
    w1 into categorical/numerical halves (BN_num only scales the numerical
    rows), zero-pad the hidden dims to 128 lanes (exact: zero weights/bias,
    ReLU(0)=0), and cast the MXU operands to compute_dtype (biases stay f32)."""
    ncat = raw["num_categorical_cols"]
    s_n, t_n = _bn_scale_shift(raw["bn_num"])
    s1, t1 = _bn_scale_shift(raw["bn1"])
    s2, t2 = _bn_scale_shift(raw["bn2"])

    # BN on numericals folded into the numerical rows of w1 and into b1.
    w1_cat = raw["w1"][:ncat]
    w1_num = s_n[:, None] * raw["w1"][ncat:]
    b1 = raw["b1"] + t_n @ raw["w1"][ncat:]

    # BN1 affine folded into (w2, b2); BN2 affine folded into (w3, b3).
    w2 = s1[:, None] * raw["w2"]
    b2 = raw["b2"] + t1 @ raw["w2"]
    w3 = s2[:, None] * raw["w3"]
    b3 = raw["b3"] + t2 @ raw["w3"]

    h1, h2 = raw["w2"].shape
    out_size = w3.shape[1]
    h1p = _round_up(h1, 128)
    h2p = _round_up(h2, 128)

    # Lane-pad hidden dims (exact). Output dim stays narrow (stored directly).
    w1_cat = jnp.pad(w1_cat, ((0, 0), (0, h1p - h1)))
    w1_num = jnp.pad(w1_num, ((0, 0), (0, h1p - h1)))
    b1 = jnp.pad(b1, ((0, h1p - h1),))
    w2 = jnp.pad(w2, ((0, h1p - h1), (0, h2p - h2)))
    b2 = jnp.pad(b2, ((0, h2p - h2),))
    w3 = jnp.pad(w3, ((0, h2p - h2), (0, 0)))

    return dict(
        w1_cat=w1_cat.astype(compute_dtype),
        w1_num=w1_num.astype(compute_dtype),
        b1=b1.reshape(1, -1).astype(jnp.float32),
        w2=w2.astype(compute_dtype),
        b2=b2.reshape(1, -1).astype(jnp.float32),
        w3=w3.astype(compute_dtype),
        b3=b3.reshape(1, -1).astype(jnp.float32),
        out_size=out_size,
    )


def reference_forward(x_cat, x_num, raw):
    """Pure-JAX eval-mode forward with UN-folded BN (checks the folds exactly)."""
    s_n, t_n = _bn_scale_shift(raw["bn_num"])
    s1, t1 = _bn_scale_shift(raw["bn1"])
    s2, t2 = _bn_scale_shift(raw["bn2"])
    xn = x_num * s_n + t_n
    x = jnp.concatenate([x_cat, xn], axis=1)
    h = jnp.maximum(x @ raw["w1"] + raw["b1"], 0.0) * s1 + t1
    h = jnp.maximum(h @ raw["w2"] + raw["b2"], 0.0) * s2 + t2
    return h @ raw["w3"] + raw["b3"]


if __name__ == "__main__":
    # Model config (small): embeddings -> 4+3+2 = 9 categorical feature cols,
    # 6 numerical cols, hidden layers [32, 16], output_size 4, batch 8.
    embedding_size = [(10, 4), (8, 3), (6, 2)]
    num_numerical_cols = 6
    output_size = 4
    layers = [32, 16]
    batch = 8

    key = jax.random.PRNGKey(0)
    k_par, k_cat, k_num = jax.random.split(key, 3)

    raw = init_raw_params(k_par, embedding_size, num_numerical_cols,
                          output_size, layers)
    num_categorical_cols = raw["num_categorical_cols"]

    x_categorical = jax.random.normal(
        k_cat, (batch, num_categorical_cols), jnp.float32)
    x_numerical = jax.random.normal(
        k_num, (batch, num_numerical_cols), jnp.float32)

    ref = reference_forward(x_categorical, x_numerical, raw)

    # f32 MXU path: must match the un-folded reference closely (tight tol).
    p_f32 = prepare_params(raw, compute_dtype=jnp.float32)
    out_f32 = jax.block_until_ready(
        fused_tabular_mlp(x_categorical, x_numerical, p_f32))
    assert out_f32.shape == (batch, output_size)
    assert jnp.allclose(out_f32, ref, atol=1e-4, rtol=1e-4)

    # bf16 MXU operands / f32 accumulation (works on v5e/v6e/v7x): looser tol.
    p_bf16 = prepare_params(raw, compute_dtype=jnp.bfloat16)
    out_bf16 = jax.block_until_ready(
        fused_tabular_mlp(x_categorical, x_numerical, p_bf16))
    assert out_bf16.shape == (batch, output_size)
    assert jnp.allclose(out_bf16, ref, atol=5e-2, rtol=5e-2)

    # TODO(synk): training-mode dropout / batch-statistic BatchNorm not
    # implemented (eval-mode semantics only).
    print("KERNEL_OK")
</pallas_src>

<mosaic_0001>
module attributes {stable_mosaic.version = 11 : i64} {
  func.func @fused_mlp_kernel(%arg0: i32, %arg1: memref<8x9xf32, #tpu.memory_space<vmem>>, %arg2: memref<8x6xf32, #tpu.memory_space<vmem>>, %arg3: memref<9x128xf32, #tpu.memory_space<vmem>>, %arg4: memref<6x128xf32, #tpu.memory_space<vmem>>, %arg5: memref<1x128xf32, #tpu.memory_space<vmem>>, %arg6: memref<128x128xf32, #tpu.memory_space<vmem>>, %arg7: memref<1x128xf32, #tpu.memory_space<vmem>>, %arg8: memref<128x4xf32, #tpu.memory_space<vmem>>, %arg9: memref<1x4xf32, #tpu.memory_space<vmem>>, %arg10: memref<8x4xf32, #tpu.memory_space<vmem>>) attributes {dimension_semantics = [#tpu.dimension_semantics<parallel>], iteration_bounds = array<i64: 1>, scalar_prefetch = 0 : i64, scratch_operands = 0 : i64, tpu.core_type = #tpu.core_type<tc>, window_params = [{transform_indices = @transform_0, window_bounds = array<i64: 8, 9>}, {transform_indices = @transform_1, window_bounds = array<i64: 8, 6>}, {pipeline_mode = #tpu.pipeline_mode<synchronous>, transform_indices = @transform_2, window_bounds = array<i64: 9, 128>}, {pipeline_mode = #tpu.pipeline_mode<synchronous>, transform_indices = @transform_3, window_bounds = array<i64: 6, 128>}, {pipeline_mode = #tpu.pipeline_mode<synchronous>, transform_indices = @transform_4, window_bounds = array<i64: 1, 128>}, {pipeline_mode = #tpu.pipeline_mode<synchronous>, transform_indices = @transform_5, window_bounds = array<i64: 128, 128>}, {pipeline_mode = #tpu.pipeline_mode<synchronous>, transform_indices = @transform_6, window_bounds = array<i64: 1, 128>}, {pipeline_mode = #tpu.pipeline_mode<synchronous>, transform_indices = @transform_7, window_bounds = array<i64: 128, 4>}, {pipeline_mode = #tpu.pipeline_mode<synchronous>, transform_indices = @transform_8, window_bounds = array<i64: 1, 4>}, {transform_indices = @transform_9, window_bounds = array<i64: 8, 4>}]} {
    %c0 = arith.constant 0 : index
    %c0_0 = arith.constant 0 : index
    %0 = vector.load %arg3[%c0, %c0_0] : memref<9x128xf32, #tpu.memory_space<vmem>>, vector<9x128xf32>
    %c0_1 = arith.constant 0 : index
    %c0_2 = arith.constant 0 : index
    %1 = vector.load %arg1[%c0_1, %c0_2] : memref<8x9xf32, #tpu.memory_space<vmem>>, vector<8x9xf32>
    %c0_3 = arith.constant 0 : index
    %c0_4 = arith.constant 0 : index
    %2 = vector.load %arg2[%c0_3, %c0_4] : memref<8x6xf32, #tpu.memory_space<vmem>>, vector<8x6xf32>
    %cst = arith.constant dense<0.000000e+00> : vector<8x128xf32>
    %3 = tpu.matmul %1, %0, %cst {dimension_numbers = #tpu.dot_dimension_numbers<[1], [0], [0], [1], [0, 0, 1, 1], [], []>} : vector<8x9xf32>, vector<9x128xf32>, vector<8x128xf32> -> vector<8x128xf32>
    %c0_5 = arith.constant 0 : index
    %c0_6 = arith.constant 0 : index
    %4 = vector.load %arg4[%c0_5, %c0_6] : memref<6x128xf32, #tpu.memory_space<vmem>>, vector<6x128xf32>
    %cst_7 = arith.constant dense<0.000000e+00> : vector<8x128xf32>
    %5 = tpu.matmul %2, %4, %cst_7 {dimension_numbers = #tpu.dot_dimension_numbers<[1], [0], [0], [1], [0, 0, 1, 1], [], []>} : vector<8x6xf32>, vector<6x128xf32>, vector<8x128xf32> -> vector<8x128xf32>
    %6 = arith.addf %3, %5 : vector<8x128xf32>
    %c0_8 = arith.constant 0 : index
    %c0_9 = arith.constant 0 : index
    %7 = vector.load %arg5[%c0_8, %c0_9] : memref<1x128xf32, #tpu.memory_space<vmem>>, vector<1x128xf32>
    %8 = vector.broadcast %7 : vector<1x128xf32> to vector<8x128xf32>
    %9 = arith.addf %6, %8 : vector<8x128xf32>
    %cst_10 = arith.constant 0.000000e+00 : f32
    %10 = vector.broadcast %cst_10 : f32 to vector<8x128xf32>
    %11 = arith.maximumf %9, %10 : vector<8x128xf32>
    %c0_11 = arith.constant 0 : index
    %c0_12 = arith.constant 0 : index
    %12 = vector.load %arg6[%c0_11, %c0_12] : memref<128x128xf32, #tpu.memory_space<vmem>>, vector<128x128xf32>
    %cst_13 = arith.constant dense<0.000000e+00> : vector<8x128xf32>
    %13 = tpu.matmul %11, %12, %cst_13 {dimension_numbers = #tpu.dot_dimension_numbers<[1], [0], [0], [1], [0, 0, 1, 1], [], []>} : vector<8x128xf32>, vector<128x128xf32>, vector<8x128xf32> -> vector<8x128xf32>
    %c0_14 = arith.constant 0 : index
    %c0_15 = arith.constant 0 : index
    %14 = vector.load %arg7[%c0_14, %c0_15] : memref<1x128xf32, #tpu.memory_space<vmem>>, vector<1x128xf32>
    %15 = vector.broadcast %14 : vector<1x128xf32> to vector<8x128xf32>
    %16 = arith.addf %13, %15 : vector<8x128xf32>
    %cst_16 = arith.constant 0.000000e+00 : f32
    %17 = vector.broadcast %cst_16 : f32 to vector<8x128xf32>
    %18 = arith.maximumf %16, %17 : vector<8x128xf32>
    %c0_17 = arith.constant 0 : index
    %c0_18 = arith.constant 0 : index
    %19 = vector.load %arg8[%c0_17, %c0_18] : memref<128x4xf32, #tpu.memory_space<vmem>>, vector<128x4xf32>
    %cst_19 = arith.constant dense<0.000000e+00> : vector<8x4xf32>
    %20 = tpu.matmul %18, %19, %cst_19 {dimension_numbers = #tpu.dot_dimension_numbers<[1], [0], [0], [1], [0, 0, 1, 1], [], []>} : vector<8x128xf32>, vector<128x4xf32>, vector<8x4xf32> -> vector<8x4xf32>
    %c0_20 = arith.constant 0 : index
    %c0_21 = arith.constant 0 : index
    %21 = vector.load %arg9[%c0_20, %c0_21] : memref<1x4xf32, #tpu.memory_space<vmem>>, vector<1x4xf32>
    %22 = vector.broadcast %21 : vector<1x4xf32> to vector<8x4xf32>
    %23 = arith.addf %20, %22 : vector<8x4xf32>
    %c0_22 = arith.constant 0 : index
    %c0_23 = arith.constant 0 : index
    %24 = vector.load %arg10[%c0_22, %c0_23] : memref<8x4xf32, #tpu.memory_space<vmem>>, vector<8x4xf32>
    tpu.vector_store %arg10[%c0_22, %c0_23], %23 {strides = array<i32>} : memref<8x4xf32, #tpu.memory_space<vmem>>, vector<8x4xf32>,
    return
  }
  func.func @transform_0(%arg0: i32) -> (i32, i32) {
    %c0_i32 = arith.constant 0 : i32
    %c0_i32_0 = arith.constant 0 : i32
    return %arg0, %c0_i32 : i32, i32
  }
  func.func @transform_1(%arg0: i32) -> (i32, i32) {
    %c0_i32 = arith.constant 0 : i32
    %c0_i32_0 = arith.constant 0 : i32
    return %arg0, %c0_i32 : i32, i32
  }
  func.func @transform_2(%arg0: i32) -> (i32, i32) {
    %c0_i32 = arith.constant 0 : i32
    %c0_i32_0 = arith.constant 0 : i32
    %c0_i32_1 = arith.constant 0 : i32
    return %c0_i32, %c0_i32_0 : i32, i32
  }
  func.func @transform_3(%arg0: i32) -> (i32, i32) {
    %c0_i32 = arith.constant 0 : i32
    %c0_i32_0 = arith.constant 0 : i32
    %c0_i32_1 = arith.constant 0 : i32
    return %c0_i32, %c0_i32_0 : i32, i32
  }
  func.func @transform_4(%arg0: i32) -> (i32, i32) {
    %c0_i32 = arith.constant 0 : i32
    %c0_i32_0 = arith.constant 0 : i32
    %c0_i32_1 = arith.constant 0 : i32
    return %c0_i32, %c0_i32_0 : i32, i32
  }
  func.func @transform_5(%arg0: i32) -> (i32, i32) {
    %c0_i32 = arith.constant 0 : i32
    %c0_i32_0 = arith.constant 0 : i32
    %c0_i32_1 = arith.constant 0 : i32
    return %c0_i32, %c0_i32_0 : i32, i32
  }
  func.func @transform_6(%arg0: i32) -> (i32, i32) {
    %c0_i32 = arith.constant 0 : i32
    %c0_i32_0 = arith.constant 0 : i32
    %c0_i32_1 = arith.constant 0 : i32
    return %c0_i32, %c0_i32_0 : i32, i32
  }
  func.func @transform_7(%arg0: i32) -> (i32, i32) {
    %c0_i32 = arith.constant 0 : i32
    %c0_i32_0 = arith.constant 0 : i32
    %c0_i32_1 = arith.constant 0 : i32
    return %c0_i32, %c0_i32_0 : i32, i32
  }
  func.func @transform_8(%arg0: i32) -> (i32, i32) {
    %c0_i32 = arith.constant 0 : i32
    %c0_i32_0 = arith.constant 0 : i32
    %c0_i32_1 = arith.constant 0 : i32
    return %c0_i32, %c0_i32_0 : i32, i32
  }
  func.func @transform_9(%arg0: i32) -> (i32, i32) {
    %c0_i32 = arith.constant 0 : i32
    %c0_i32_0 = arith.constant 0 : i32
    return %arg0, %c0_i32 : i32, i32
  }
}

</mosaic_0001>

<llo_original>
// kernel: tpu_custom_call.1
$region0: #{tpu_custom_call.1}
  #allocation0 [shape = 'u32[]', space=smem, size = 0x4, offset = 0x4, fixed_abs, tag = 'smem constant byte address 0x4 - core index']
  #allocation1 [shape = 'u32[144,128]{1,0:T(1,128)}', space=vmem, size = 0x12000, scoped, tag = 'internal scratch']
  %s0 = inlined_call_operand.vmem [shape: f32[8,9], index: 0, kind: input, shape index: {}]
  %s1 = inlined_call_operand.hbm [shape: f32[8,6], index: 1, kind: input, shape index: {}]
  %s2 = inlined_call_operand.hbm [shape: f32[9,128], index: 2, kind: input, shape index: {}]
  %s3 = inlined_call_operand.hbm [shape: f32[6,128], index: 3, kind: input, shape index: {}]
  %s4 = inlined_call_operand.vmem [shape: f32[1,128], index: 4, kind: input, shape index: {}]
  %s5 = inlined_call_operand.vmem [shape: f32[128,128], index: 5, kind: input, shape index: {}]
  %s6 = inlined_call_operand.vmem [shape: f32[1,128], index: 6, kind: input, shape index: {}]
  %s7 = inlined_call_operand.vmem [shape: f32[128,4], index: 7, kind: input, shape index: {}]
  %s8 = inlined_call_operand.vmem [shape: f32[1,4], index: 8, kind: input, shape index: {}]
  %s9 = inlined_call_operand.vmem [shape: f32[8,4], index: 9, kind: output, shape index: {}]
  %s10 = sld [smem:[#allocation0]]
  $region58: #{tpu_custom_call.1} parent=0
    _
  %s12 = ssub.s32 1, %s10
  %s13 = scalar_select 0, %s12, %s10
  $region1: #{tpu_custom_call.1} parent=0
    #allocation2 [shape = 'u8[4096]{0}', space=vmem, size = 0x1000, scoped, tag = 'input window, operand 1, single buffered']
    #allocation3 [shape = 's32[1]{0}', space=sflag, size = 0x4, scoped, tag = 'scoped memory for tpu_custom_call.1']
    #allocation4 [shape = 'u8[8192]{0}', space=vmem, size = 0x2000, scoped, tag = 'input window, operand 2, single buffered']
    #allocation5 [shape = 's32[1]{0}', space=sflag, size = 0x4, scoped, tag = 'scoped memory for tpu_custom_call.1']
    #allocation6 [shape = 'u8[4096]{0}', space=vmem, size = 0x1000, scoped, tag = 'input window, operand 3, single buffered']
    %14 = vsyncpa [#allocation3], 0
    %15 = vsyncpa [#allocation5], 0
    // Predicated region
    $region2: #{tpu_custom_call.1} parent=1 // pred_check
      _
    $region3: #{tpu_custom_call.1} parent=1 // pred_check_branch
      %17 = sbr.rel (0) target = $region5
    $region4: #{tpu_custom_call.1} parent=1 // pred_region
      _
    $region5: #{tpu_custom_call.1} parent=1 // pred_fallthru
      _
    // Predicated region
    $region6: #{tpu_custom_call.1} parent=1 // pred_check
      _
    $region7: #{tpu_custom_call.1} parent=1 // pred_check_branch
      %19 = sbr.rel (0) target = $region9
    $region8: #{tpu_custom_call.1} parent=1 // pred_region
      %s21 = ssub.s32 128, 128
      %22 = vsyncadd [#allocation3], %s21
      %s24 = sshll.u32 [#allocation2], 4
      %s25 = int_to_ptr.vmem [resolvable:$true] %s24
      %27 = dma.hbm_to_vmem [thread:$0]  %s1, 128, %s25, [#allocation3]
    $region9: #{tpu_custom_call.1} parent=1 // pred_fallthru
      _
    // Predicated region
    $region10: #{tpu_custom_call.1} parent=1 // pred_check
      _
    $region11: #{tpu_custom_call.1} parent=1 // pred_check_branch
      %29 = sbr.rel (0) target = $region13
    $region12: #{tpu_custom_call.1} parent=1 // pred_region
      %s31 = ssub.s32 256, 256
      %32 = vsyncadd [#allocation5], %s31
      %s33 = sshll.u32 [#allocation4], 4
      %s34 = int_to_ptr.vmem [resolvable:$true] %s33
      %39 = dma.hbm_to_vmem [thread:$0]  %s2, 256, %s34, [#allocation5], 128, 128, 8
    $region13: #{tpu_custom_call.1} parent=1 // pred_fallthru
      _
    // Predicated region
    $region14: #{tpu_custom_call.1} parent=1 // pred_check
      _
    $region15: #{tpu_custom_call.1} parent=1 // pred_check_branch
      %41 = sbr.rel (0) target = $region17
    $region16: #{tpu_custom_call.1} parent=1 // pred_region
      %s43 = ssub.s32 128, 128
      %44 = vsyncadd [#allocation5], %s43
      %s46 = sshll.u32 [#allocation6], 4
      %s47 = int_to_ptr.vmem [resolvable:$true] %s46
      %49 = dma.hbm_to_vmem [thread:$0]  %s3, 128, %s47, [#allocation5]
    $region17: #{tpu_custom_call.1} parent=1 // pred_fallthru
      _
    // Predicated region
    $region18: #{tpu_custom_call.1} parent=1 // pred_check
      _
    $region19: #{tpu_custom_call.1} parent=1 // pred_check_branch
      %51 = sbr.rel (0) target = $region21
    $region20: #{tpu_custom_call.1} parent=1 // pred_region
      _
    $region21: #{tpu_custom_call.1} parent=1 // pred_fallthru
      _
    // Predicated region
    $region22: #{tpu_custom_call.1} parent=1 // pred_check
      _
    $region23: #{tpu_custom_call.1} parent=1 // pred_check_branch
      %53 = sbr.rel (0) target = $region25
    $region24: #{tpu_custom_call.1} parent=1 // pred_region
      _
    $region25: #{tpu_custom_call.1} parent=1 // pred_fallthru
      _
    // Predicated region
    $region26: #{tpu_custom_call.1} parent=1 // pred_check
      _
    $region27: #{tpu_custom_call.1} parent=1 // pred_check_branch
      %55 = sbr.rel (0) target = $region29
    $region28: #{tpu_custom_call.1} parent=1 // pred_region
      _
    $region29: #{tpu_custom_call.1} parent=1 // pred_fallthru
      _
    // Predicated region
    $region30: #{tpu_custom_call.1} parent=1 // pred_check
      _
    $region31: #{tpu_custom_call.1} parent=1 // pred_check_branch
      %57 = sbr.rel (0) target = $region33
    $region32: #{tpu_custom_call.1} parent=1 // pred_region
      _
    $region33: #{tpu_custom_call.1} parent=1 // pred_fallthru
      _
    // Predicated region
    $region34: #{tpu_custom_call.1} parent=1 // pred_check
      _
    $region35: #{tpu_custom_call.1} parent=1 // pred_check_branch
      %59 = sbr.rel (0) target = $region37
    $region36: #{tpu_custom_call.1} parent=1 // pred_region
      _
    $region37: #{tpu_custom_call.1} parent=1 // pred_fallthru
      _
    // Predicated region
    $region38: #{tpu_custom_call.1} parent=1 // pred_check
      _
    $region39: #{tpu_custom_call.1} parent=1 // pred_check_branch
      %61 = sbr.rel (0) target = $region41
    $region40: #{tpu_custom_call.1} parent=1 // pred_region
      %62 = dma.done [#allocation3], 128
    $region41: #{tpu_custom_call.1} parent=1 // pred_fallthru
      _
    // Predicated region
    $region42: #{tpu_custom_call.1} parent=1 // pred_check
      _
    $region43: #{tpu_custom_call.1} parent=1 // pred_check_branch
      %64 = sbr.rel (0) target = $region45
    $region44: #{tpu_custom_call.1} parent=1 // pred_region
      %65 = dma.done [#allocation5], 256
    $region45: #{tpu_custom_call.1} parent=1 // pred_fallthru
      _
    // Predicated region
    $region46: #{tpu_custom_call.1} parent=1 // pred_check
      _
    $region47: #{tpu_custom_call.1} parent=1 // pred_check_branch
      %67 = sbr.rel (0) target = $region49
    $region48: #{tpu_custom_call.1} parent=1 // pred_region
      %68 = dma.done [#allocation5], 128
    $region49: #{tpu_custom_call.1} parent=1 // pred_fallthru
      _
    %v69 = vld [vmem:[#allocation4] sm:$0xff]
    %v70 = vld [vmem:[#allocation4 + $0x8] sm:$0x1]
    %v71 = vld [vmem:[%s0] sm:$0xff]
    %v72 = vld [vmem:[#allocation2] sm:$0xff]
    %v73 = vld [vmem:[#allocation6] sm:$0x3f]
    %vm74 = vcmask 48128
    %v76 = vsel %vm74, %v72, 0
    %vm78 = vcmask 1045504
    %v80 = vsel %vm78, %v73, 0
    %82 = vmatprep.subr.mxu0 0.0
    %83 = vmatpush1.msra.mxu0 0.0
    %84 = vmatprep.subr.mxu0 0.0
    %85 = vmatpush1.msra.mxu0 0.0
    %86 = vmatprep.subr.mxu0 0.0
    %87 = vmatpush1.msra.mxu0 0.0
    %88 = vmatprep.subr.mxu0 0.0
    %89 = vmatpush1.msra.mxu0 0.0
    %90 = vmatprep.subr.mxu0 0.0
    %91 = vmatpush1.msra.mxu0 0.0
    %92 = vmatprep.subr.mxu0 0.0
    %93 = vmatpush1.msra.mxu0 0.0
    %94 = vmatprep.subr.mxu0 0.0
    %95 = vmatpush1.msra.mxu0 0.0
    %96 = vmatprep.subr.mxu0 0.0
    %97 = vmatpush1.msra.mxu0 0.0
    %98 = vmatprep.subr.mxu0 0.0
    %99 = vmatpush1.msra.mxu0 0.0
    %100 = vmatprep.subr.mxu0 0.0
    %101 = vmatpush1.msra.mxu0 0.0
    %102 = vmatprep.subr.mxu0 0.0
    %103 = vmatpush1.msra.mxu0 0.0
    %104 = vmatprep.subr.mxu0 0.0
    %105 = vmatpush1.msra.mxu0 0.0
    %106 = vmatprep.subr.mxu0 0.0
    %107 = vmatpush1.msra.mxu0 0.0
    %108 = vmatprep.subr.mxu0 0.0
    %109 = vmatpush1.msra.mxu0 0.0
    %110 = vmatprep.subr.mxu0 0.0
    %111 = vmatpush1.msra.mxu0 0.0
    %112 = vmatprep.subr.mxu0 0.0
    %113 = vmatpush1.msra.mxu0 %v80
    %114 = vmatprep.subr.mxu0 0.0
    %115 = vmatpush2.msra.mxu0 0.0
    %116 = vmatprep.subr.mxu0 0.0
    %117 = vmatpush2.msra.mxu0 0.0
    %118 = vmatprep.subr.mxu0 0.0
    %119 = vmatpush2.msra.mxu0 0.0
    %120 = vmatprep.subr.mxu0 0.0
    %121 = vmatpush2.msra.mxu0 0.0
    %122 = vmatprep.subr.mxu0 0.0
    %123 = vmatpush2.msra.mxu0 0.0
    %124 = vmatprep.subr.mxu0 0.0
    %125 = vmatpush2.msra.mxu0 0.0
    %126 = vmatprep.subr.mxu0 0.0
    %127 = vmatpush2.msra.mxu0 0.0
    %128 = vmatprep.subr.mxu0 0.0
    %129 = vmatpush2.msra.mxu0 0.0
    %130 = vmatprep.subr.mxu0 0.0
    %131 = vmatpush2.msra.mxu0 0.0
    %132 = vmatprep.subr.mxu0 0.0
    %133 = vmatpush2.msra.mxu0 0.0
    %134 = vmatprep.subr.mxu0 0.0
    %135 = vmatpush2.msra.mxu0 0.0
    %136 = vmatprep.subr.mxu0 0.0
    %137 = vmatpush2.msra.mxu0 0.0
    %138 = vmatprep.subr.mxu0 0.0
    %139 = vmatpush2.msra.mxu0 0.0
    %140 = vmatprep.subr.mxu0 0.0
    %141 = vmatpush2.msra.mxu0 0.0
    %142 = vmatprep.subr.mxu0 0.0
    %143 = vmatpush2.msra.mxu0 0.0
    %144 = vmatprep.subr.mxu0 0.0
    %145 = vmatpush2.msra.mxu0 0.0
    %146 = vmatprep.mubr.f32.mxu0 0.0
    %147 = vmatmul.mubr.f32.gmra.mxu0 %v76
    %v148 = vpop.f32.mrf.mxu0
    %v149 = vadd.f32 0.0, %v148
    %v150 = vpop.f32.mrf.mxu0
    %151 = vdwg.mxu0
    %vm152 = vcmask 72704
    %v154 = vsel %vm152, %v71, 0
    %vm156 = vcmask 1040384
    %v158 = vsel %vm156, %v70, 0
    %160 = vmatprep.subr.mxu0 0.0
    %161 = vmatpush1.msra.mxu0 0.0
    %162 = vmatprep.subr.mxu0 0.0
    %163 = vmatpush1.msra.mxu0 0.0
    %164 = vmatprep.subr.mxu0 0.0
    %165 = vmatpush1.msra.mxu0 0.0
    %166 = vmatprep.subr.mxu0 0.0
    %167 = vmatpush1.msra.mxu0 0.0
    %168 = vmatprep.subr.mxu0 0.0
    %169 = vmatpush1.msra.mxu0 0.0
    %170 = vmatprep.subr.mxu0 0.0
    %171 = vmatpush1.msra.mxu0 0.0
    %172 = vmatprep.subr.mxu0 0.0
    %173 = vmatpush1.msra.mxu0 0.0
    %174 = vmatprep.subr.mxu0 0.0
    %175 = vmatpush1.msra.mxu0 0.0
    %176 = vmatprep.subr.mxu0 0.0
    %177 = vmatpush1.msra.mxu0 0.0
    %178 = vmatprep.subr.mxu0 0.0
    %179 = vmatpush1.msra.mxu0 0.0
    %180 = vmatprep.subr.mxu0 0.0
    %181 = vmatpush1.msra.mxu0 0.0
    %182 = vmatprep.subr.mxu0 0.0
    %183 = vmatpush1.msra.mxu0 0.0
    %184 = vmatprep.subr.mxu0 0.0
    %185 = vmatpush1.msra.mxu0 0.0
    %186 = vmatprep.subr.mxu0 0.0
    %187 = vmatpush1.msra.mxu0 0.0
    %188 = vmatprep.subr.mxu0 0.0
    %189 = vmatpush1.msra.mxu0 %v158
    %190 = vmatprep.subr.mxu0 0.0
    %191 = vmatpush1.msra.mxu0 %v69
    %192 = vmatprep.subr.mxu0 0.0
    %193 = vmatpush2.msra.mxu0 0.0
    %194 = vmatprep.subr.mxu0 0.0
    %195 = vmatpush2.msra.mxu0 0.0
    %196 = vmatprep.subr.mxu0 0.0
    %197 = vmatpush2.msra.mxu0 0.0
    %198 = vmatprep.subr.mxu0 0.0
    %199 = vmatpush2.msra.mxu0 0.0
    %200 = vmatprep.subr.mxu0 0.0
    %201 = vmatpush2.msra.mxu0 0.0
    %202 = vmatprep.subr.mxu0 0.0
    %203 = vmatpush2.msra.mxu0 0.0
    %204 = vmatprep.subr.mxu0 0.0
    %205 = vmatpush2.msra.mxu0 0.0
    %206 = vmatprep.subr.mxu0 0.0
    %207 = vmatpush2.msra.mxu0 0.0
    %208 = vmatprep.subr.mxu0 0.0
    %209 = vmatpush2.msra.mxu0 0.0
    %210 = vmatprep.subr.mxu0 0.0
    %211 = vmatpush2.msra.mxu0 0.0
    %212 = vmatprep.subr.mxu0 0.0
    %213 = vmatpush2.msra.mxu0 0.0
    %214 = vmatprep.subr.mxu0 0.0
    %215 = vmatpush2.msra.mxu0 0.0
    %216 = vmatprep.subr.mxu0 0.0
    %217 = vmatpush2.msra.mxu0 0.0
    %218 = vmatprep.subr.mxu0 0.0
    %219 = vmatpush2.msra.mxu0 0.0
    %220 = vmatprep.subr.mxu0 0.0
    %221 = vmatpush2.msra.mxu0 0.0
    %222 = vmatprep.subr.mxu0 0.0
    %223 = vmatpush2.msra.mxu0 0.0
    %224 = vmatprep.mubr.f32.mxu0 0.0
    %225 = vmatmul.mubr.f32.gmra.mxu0 %v154
    %v226 = vpop.f32.mrf.mxu0
    %v227 = vadd.f32 %v149, %v226
    %v228 = vpop.f32.mrf.mxu0
    %229 = vdwg.mxu0
    %v230 = vld [vmem:[%s4] sm:$0x1]
    %v232 = vlaneseq
    %v233 = vshrl.u32 %v232, 7
    %v234 = vsub.s32 0, %v233
    %v235 = vrot.slane %v230, %v234
    %v237 = vadd.f32 %v227, %v235
    %v238 = vmax.f32 %v237, 0.0
    %v239 = vld [vmem:[%s5] sm:$0xff]
    %v240 = vld [vmem:[%s5 + $0x8] sm:$0xff]
    %v241 = vld [vmem:[%s5 + $0x10] sm:$0xff]
    %v242 = vld [vmem:[%s5 + $0x18] sm:$0xff]
    %v243 = vld [vmem:[%s5 + $0x20] sm:$0xff]
    %v244 = vld [vmem:[%s5 + $0x28] sm:$0xff]
    %v245 = vld [vmem:[%s5 + $0x30] sm:$0xff]
    %v246 = vld [vmem:[%s5 + $0x38] sm:$0xff]
    %v247 = vld [vmem:[%s5 + $0x40] sm:$0xff]
    %v248 = vld [vmem:[%s5 + $0x48] sm:$0xff]
    %v249 = vld [vmem:[%s5 + $0x50] sm:$0xff]
    %v250 = vld [vmem:[%s5 + $0x58] sm:$0xff]
    %v251 = vld [vmem:[%s5 + $0x60] sm:$0xff]
    %v252 = vld [vmem:[%s5 + $0x68] sm:$0xff]
    %v253 = vld [vmem:[%s5 + $0x70] sm:$0xff]
    %v254 = vld [vmem:[%s5 + $0x78] sm:$0xff]
    %v255 = vld [vmem:[%s6] sm:$0x1]
    %v257 = vlaneseq
    %v258 = vshrl.u32 %v257, 7
    %v259 = vsub.s32 0, %v258
    %v260 = vrot.slane %v255, %v259
    %262 = vmatprep.subr.mxu0 0.0
    %263 = vmatpush1.msra.mxu0 %v254
    %264 = vmatprep.subr.mxu0 0.0
    %265 = vmatpush1.msra.mxu0 %v253
    %266 = vmatprep.subr.mxu0 0.0
    %267 = vmatpush1.msra.mxu0 %v252
    %268 = vmatprep.subr.mxu0 0.0
    %269 = vmatpush1.msra.mxu0 %v251
    %270 = vmatprep.subr.mxu0 0.0
    %271 = vmatpush1.msra.mxu0 %v250
    %272 = vmatprep.subr.mxu0 0.0
    %273 = vmatpush1.msra.mxu0 %v249
    %274 = vmatprep.subr.mxu0 0.0
    %275 = vmatpush1.msra.mxu0 %v248
    %276 = vmatprep.subr.mxu0 0.0
    %277 = vmatpush1.msra.mxu0 %v247
    %278 = vmatprep.subr.mxu0 0.0
    %279 = vmatpush1.msra.mxu0 %v246
    %280 = vmatprep.subr.mxu0 0.0
    %281 = vmatpush1.msra.mxu0 %v245
    %282 = vmatprep.subr.mxu0 0.0
    %283 = vmatpush1.msra.mxu0 %v244
    %284 = vmatprep.subr.mxu0 0.0
    %285 = vmatpush1.msra.mxu0 %v243
    %286 = vmatprep.subr.mxu0 0.0
    %287 = vmatpush1.msra.mxu0 %v242
    %288 = vmatprep.subr.mxu0 0.0
    %289 = vmatpush1.msra.mxu0 %v241
    %290 = vmatprep.subr.mxu0 0.0
    %291 = vmatpush1.msra.mxu0 %v240
    %292 = vmatprep.subr.mxu0 0.0
    %293 = vmatpush1.msra.mxu0 %v239
    %294 = vmatprep.subr.mxu0 0.0
    %295 = vmatpush2.msra.mxu0 0.0
    %296 = vmatprep.subr.mxu0 0.0
    %297 = vmatpush2.msra.mxu0 0.0
    %298 = vmatprep.subr.mxu0 0.0
    %299 = vmatpush2.msra.mxu0 0.0
    %300 = vmatprep.subr.mxu0 0.0
    %301 = vmatpush2.msra.mxu0 0.0
    %302 = vmatprep.subr.mxu0 0.0
    %303 = vmatpush2.msra.mxu0 0.0
    %304 = vmatprep.subr.mxu0 0.0
    %305 = vmatpush2.msra.mxu0 0.0
    %306 = vmatprep.subr.mxu0 0.0
    %307 = vmatpush2.msra.mxu0 0.0
    %308 = vmatprep.subr.mxu0 0.0
    %309 = vmatpush2.msra.mxu0 0.0
    %310 = vmatprep.subr.mxu0 0.0
    %311 = vmatpush2.msra.mxu0 0.0
    %312 = vmatprep.subr.mxu0 0.0
    %313 = vmatpush2.msra.mxu0 0.0
    %314 = vmatprep.subr.mxu0 0.0
    %315 = vmatpush2.msra.mxu0 0.0
    %316 = vmatprep.subr.mxu0 0.0
    %317 = vmatpush2.msra.mxu0 0.0
    %318 = vmatprep.subr.mxu0 0.0
    %319 = vmatpush2.msra.mxu0 0.0
    %320 = vmatprep.subr.mxu0 0.0
    %321 = vmatpush2.msra.mxu0 0.0
    %322 = vmatprep.subr.mxu0 0.0
    %323 = vmatpush2.msra.mxu0 0.0
    %324 = vmatprep.subr.mxu0 0.0
    %325 = vmatpush2.msra.mxu0 0.0
    %326 = vmatprep.mubr.f32.mxu0 0.0
    %327 = vmatmul.mubr.f32.gmra.mxu0 %v238
    %v328 = vpop.f32.mrf.mxu0
    %v329 = vadd.f32 %v260, %v328
    %v330 = vpop.f32.mrf.mxu0
    %331 = vdwg.mxu0
    %v332 = vmax.f32 %v329, 0.0
    %v333 = vld [vmem:[%s7] sm:$0xff]
    %v334 = vld [vmem:[%s7 + $0x8] sm:$0xff]
    %v335 = vld [vmem:[%s7 + $0x10] sm:$0xff]
    %v336 = vld [vmem:[%s7 + $0x18] sm:$0xff]
    %v337 = vld [vmem:[%s7 + $0x20] sm:$0xff]
    %v338 = vld [vmem:[%s7 + $0x28] sm:$0xff]
    %v339 = vld [vmem:[%s7 + $0x30] sm:$0xff]
    %v340 = vld [vmem:[%s7 + $0x38] sm:$0xff]
    %v341 = vld [vmem:[%s7 + $0x40] sm:$0xff]
    %v342 = vld [vmem:[%s7 + $0x48] sm:$0xff]
    %v343 = vld [vmem:[%s7 + $0x50] sm:$0xff]
    %v344 = vld [vmem:[%s7 + $0x58] sm:$0xff]
    %v345 = vld [vmem:[%s7 + $0x60] sm:$0xff]
    %v346 = vld [vmem:[%s7 + $0x68] sm:$0xff]
    %v347 = vld [vmem:[%s7 + $0x70] sm:$0xff]
    %v348 = vld [vmem:[%s7 + $0x78] sm:$0xff]
    %v349 = vld [vmem:[%s8] sm:$0x1]
    %v351 = vlaneseq
    %v352 = vshrl.u32 %v351, 7
    %v353 = vsub.s32 0, %v352
    %v354 = vrot.slane %v349, %v353
    %356 = vmatprep.subr.mxu0 0.0
    %357 = vmatpush1.msra.mxu0 %v348
    %358 = vmatprep.subr.mxu0 0.0
    %359 = vmatpush1.msra.mxu0 %v347
    %360 = vmatprep.subr.mxu0 0.0
    %361 = vmatpush1.msra.mxu0 %v346
    %362 = vmatprep.subr.mxu0 0.0
    %363 = vmatpush1.msra.mxu0 %v345
    %364 = vmatprep.subr.mxu0 0.0
    %365 = vmatpush1.msra.mxu0 %v344
    %366 = vmatprep.subr.mxu0 0.0
    %367 = vmatpush1.msra.mxu0 %v343
    %368 = vmatprep.subr.mxu0 0.0
    %369 = vmatpush1.msra.mxu0 %v342
    %370 = vmatprep.subr.mxu0 0.0
    %371 = vmatpush1.msra.mxu0 %v341
    %372 = vmatprep.subr.mxu0 0.0
    %373 = vmatpush1.msra.mxu0 %v340
    %374 = vmatprep.subr.mxu0 0.0
    %375 = vmatpush1.msra.mxu0 %v339
    %376 = vmatprep.subr.mxu0 0.0
    %377 = vmatpush1.msra.mxu0 %v338
    %378 = vmatprep.subr.mxu0 0.0
    %379 = vmatpush1.msra.mxu0 %v337
    %380 = vmatprep.subr.mxu0 0.0
    %381 = vmatpush1.msra.mxu0 %v336
    %382 = vmatprep.subr.mxu0 0.0
    %383 = vmatpush1.msra.mxu0 %v335
    %384 = vmatprep.subr.mxu0 0.0
    %385 = vmatpush1.msra.mxu0 %v334
    %386 = vmatprep.subr.mxu0 0.0
    %387 = vmatpush1.msra.mxu0 %v333
    %388 = vmatprep.subr.mxu0 0.0
    %389 = vmatpush2.msra.mxu0 0.0
    %390 = vmatprep.subr.mxu0 0.0
    %391 = vmatpush2.msra.mxu0 0.0
    %392 = vmatprep.subr.mxu0 0.0
    %393 = vmatpush2.msra.mxu0 0.0
    %394 = vmatprep.subr.mxu0 0.0
    %395 = vmatpush2.msra.mxu0 0.0
    %396 = vmatprep.subr.mxu0 0.0
    %397 = vmatpush2.msra.mxu0 0.0
    %398 = vmatprep.subr.mxu0 0.0
    %399 = vmatpush2.msra.mxu0 0.0
    %400 = vmatprep.subr.mxu0 0.0
    %401 = vmatpush2.msra.mxu0 0.0
    %402 = vmatprep.subr.mxu0 0.0
    %403 = vmatpush2.msra.mxu0 0.0
    %404 = vmatprep.subr.mxu0 0.0
    %405 = vmatpush2.msra.mxu0 0.0
    %406 = vmatprep.subr.mxu0 0.0
    %407 = vmatpush2.msra.mxu0 0.0
    %408 = vmatprep.subr.mxu0 0.0
    %409 = vmatpush2.msra.mxu0 0.0
    %410 = vmatprep.subr.mxu0 0.0
    %411 = vmatpush2.msra.mxu0 0.0
    %412 = vmatprep.subr.mxu0 0.0
    %413 = vmatpush2.msra.mxu0 0.0
    %414 = vmatprep.subr.mxu0 0.0
    %415 = vmatpush2.msra.mxu0 0.0
    %416 = vmatprep.subr.mxu0 0.0
    %417 = vmatpush2.msra.mxu0 0.0
    %418 = vmatprep.subr.mxu0 0.0
    %419 = vmatpush2.msra.mxu0 0.0
    %420 = vmatprep.mubr.f32.mxu0 0.0
    %421 = vmatmul.mubr.f32.gmra.mxu0 %v332
    %v422 = vpop.f32.mrf.mxu0
    %v423 = vadd.f32 %v354, %v422
    %v424 = vpop.f32.mrf.mxu0
    %425 = vdwg.mxu0
    %vm426 = vcmask 31744
    %427 = vst.msk [vmem:[%s9] sm:$0xff] %vm426, %v423
    // Predicated region
    $region50: #{tpu_custom_call.1} parent=1 // pred_check
      _
    $region51: #{tpu_custom_call.1} parent=1 // pred_check_branch
      %429 = sbr.rel (0) target = $region53
    $region52: #{tpu_custom_call.1} parent=1 // pred_region
      _
    $region53: #{tpu_custom_call.1} parent=1 // pred_fallthru
      _
    // Predicated region
    $region54: #{tpu_custom_call.1} parent=1 // pred_check
      _
    $region55: #{tpu_custom_call.1} parent=1 // pred_check_branch
      %431 = sbr.rel (0) target = $region57
    $region56: #{tpu_custom_call.1} parent=1 // pred_region
      _
    $region57: #{tpu_custom_call.1} parent=1 // pred_fallthru
      _
    %432 = vsyncpa [#allocation3], 1
    %433 = vsyncpa [#allocation5], 1

</llo_original>
